<compile_context>
chip_gen: v7x
topology: tpu7x:2x2x1
jax: 0.10.0
libtpu: 0.0.40
codegen_flags: <defaults>
</compile_context>

<pallas_src>
import functools

import jax
import jax.numpy as jnp
from jax.experimental import pallas as pl
from jax.experimental.pallas import tpu as pltpu


def mlp_kernel(x_ref, w1_ref, b1_ref, w2_ref, b2_ref,
               w3_ref, b3_ref, w4_ref, b4_ref, o_ref):
    # x_ref: (D, bb) batch tile, batch on lanes. w1..w3 are bf16 [out, in];
    # biases are f32 [out, 1]; w4 is a f32 (64, 1) column.
    xt = x_ref[...].astype(jnp.bfloat16)

    h = jnp.dot(w1_ref[...], xt, preferred_element_type=jnp.float32)
    h = jnp.maximum(h + b1_ref[...], 0.0)            # (256, bb) f32; Dropout = id

    h = jnp.dot(w2_ref[...], h.astype(jnp.bfloat16),
                preferred_element_type=jnp.float32)
    h = jnp.maximum(h + b2_ref[...], 0.0)            # (128, bb)

    h = jnp.dot(w3_ref[...], h.astype(jnp.bfloat16),
                preferred_element_type=jnp.float32)
    h = jnp.maximum(h + b3_ref[...], 0.0)            # (64, bb)

    # Final Linear(64 -> 1) on the VPU/XLU: broadcast-multiply by the (64, 1)
    # weight column and reduce over the sublane (feature) axis -> (1, bb).
    out = jnp.sum(h * w4_ref[...], axis=0, keepdims=True) + b4_ref[...]
    o_ref[...] = out.astype(o_ref.dtype)


@functools.partial(jax.jit, static_argnames=("block_b",))
def ndvi_mlp(x, params, *, block_b=512):
    B, D = x.shape
    w1, b1, w2, b2, w3, b3, w4, b4 = params

    # MXU weight operands in bf16 (cast once, outside the grid loop).
    w1b = w1.astype(jnp.bfloat16)
    w2b = w2.astype(jnp.bfloat16)
    w3b = w3.astype(jnp.bfloat16)

    # Batch tile: multiple of 128 so the output row is lane-dense, large
    # enough to amortize per-grid-step cost.
    bb = min(block_b, B)
    bb = ((bb + 127) // 128) * 128
    nb = pl.cdiv(B, bb)
    Bp = nb * bb

    # Feature-major input: batch on the lane axis, padded up to the tile grid.
    # Padded columns are garbage rows that get sliced off below.
    x_t = jnp.pad(x.T, ((0, 0), (0, Bp - B)))

    rep = lambda i: (0, 0)   # weights/biases stay resident across the batch grid

    out_t = pl.pallas_call(
        mlp_kernel,
        out_shape=jax.ShapeDtypeStruct((1, Bp), jnp.float32),
        grid=(nb,),
        in_specs=[
            pl.BlockSpec((D, bb), lambda i: (0, i)),
            pl.BlockSpec(w1b.shape, rep),
            pl.BlockSpec(b1.shape, rep),
            pl.BlockSpec(w2b.shape, rep),
            pl.BlockSpec(b2.shape, rep),
            pl.BlockSpec(w3b.shape, rep),
            pl.BlockSpec(b3.shape, rep),
            pl.BlockSpec(w4.shape, rep),
            pl.BlockSpec(b4.shape, rep),
        ],
        out_specs=pl.BlockSpec((1, bb), lambda i: (0, i)),
        compiler_params=pltpu.CompilerParams(
            dimension_semantics=("parallel",)),
    )(x_t, w1b, b1, w2b, b2, w3b, b3, w4, b4)

    # (1, Bp) lane-dense row -> (B, 1) column, dropping batch padding.
    return out_t.reshape(Bp, 1)[:B]


def init_params(key, input_size):
    """Shapes mirror the torch layers. Layers 1-3 weights are stored [out, in]
    (feature-major compute h = W @ x_t); the final 64->1 weight is stored as a
    (64, 1) column for the in-kernel VPU reduction. Biases stored [out, 1]."""
    dims = [(input_size, 256), (256, 128), (128, 64), (64, 1)]
    params = []
    for fan_in, fan_out in dims:
        key, kw, kb = jax.random.split(key, 3)
        bound = fan_in ** -0.5
        w = jax.random.uniform(kw, (fan_out, fan_in), jnp.float32, -bound, bound)
        b = jax.random.uniform(kb, (fan_out, 1), jnp.float32, -bound, bound)
        params += [w, b]
    params[6] = params[6].T          # w4: (1, 64) -> (64, 1) column layout
    return tuple(params)


def reference_mlp(x, params):
    """Pure-f32 reference with torch (eval-mode) semantics."""
    w1, b1, w2, b2, w3, b3, w4, b4 = params
    h = jnp.maximum(x @ w1.T + b1.T, 0.0)
    h = jnp.maximum(h @ w2.T + b2.T, 0.0)
    h = jnp.maximum(h @ w3.T + b3.T, 0.0)
    return h @ w4 + b4.T             # w4 already stored as (64, 1)


if __name__ == "__main__":
    key = jax.random.PRNGKey(0)
    kx, kp = jax.random.split(key)

    batch = 16
    input_size = 32          # small feature dim consistent with NDVIPredictionModel(input_size)

    x = jax.random.normal(kx, (batch, input_size), jnp.float32)
    params = init_params(kp, input_size)

    out = ndvi_mlp(x, params)
    out = jax.block_until_ready(out)

    ref = reference_mlp(x, params)
    assert out.shape == (batch, 1)
    # bf16 MXU inputs (f32 accumulation) vs. f32 reference -> loosened tolerance.
    assert jnp.allclose(out, ref, atol=2e-2, rtol=2e-2), "mismatch vs reference"

    print("KERNEL_OK")
</pallas_src>

<mosaic_0001>
module attributes {stable_mosaic.version = 11 : i64} {
  func.func @mlp_kernel(%arg0: i32, %arg1: memref<32x128xf32, #tpu.memory_space<vmem>>, %arg2: memref<256x32xbf16, #tpu.memory_space<vmem>>, %arg3: memref<256x1xf32, #tpu.memory_space<vmem>>, %arg4: memref<128x256xbf16, #tpu.memory_space<vmem>>, %arg5: memref<128x1xf32, #tpu.memory_space<vmem>>, %arg6: memref<64x128xbf16, #tpu.memory_space<vmem>>, %arg7: memref<64x1xf32, #tpu.memory_space<vmem>>, %arg8: memref<64x1xf32, #tpu.memory_space<vmem>>, %arg9: memref<1x1xf32, #tpu.memory_space<vmem>>, %arg10: memref<1x128xf32, #tpu.memory_space<vmem>>) attributes {dimension_semantics = [#tpu.dimension_semantics<parallel>], iteration_bounds = array<i64: 1>, scalar_prefetch = 0 : i64, scratch_operands = 0 : i64, tpu.core_type = #tpu.core_type<tc>, window_params = [{transform_indices = @transform_0, window_bounds = array<i64: 32, 128>}, {pipeline_mode = #tpu.pipeline_mode<synchronous>, transform_indices = @transform_1, window_bounds = array<i64: 256, 32>}, {pipeline_mode = #tpu.pipeline_mode<synchronous>, transform_indices = @transform_2, window_bounds = array<i64: 256, 1>}, {pipeline_mode = #tpu.pipeline_mode<synchronous>, transform_indices = @transform_3, window_bounds = array<i64: 128, 256>}, {pipeline_mode = #tpu.pipeline_mode<synchronous>, transform_indices = @transform_4, window_bounds = array<i64: 128, 1>}, {pipeline_mode = #tpu.pipeline_mode<synchronous>, transform_indices = @transform_5, window_bounds = array<i64: 64, 128>}, {pipeline_mode = #tpu.pipeline_mode<synchronous>, transform_indices = @transform_6, window_bounds = array<i64: 64, 1>}, {pipeline_mode = #tpu.pipeline_mode<synchronous>, transform_indices = @transform_7, window_bounds = array<i64: 64, 1>}, {pipeline_mode = #tpu.pipeline_mode<synchronous>, transform_indices = @transform_8, window_bounds = array<i64: 1, 1>}, {transform_indices = @transform_9, window_bounds = array<i64: 1, 128>}]} {
    %c0 = arith.constant 0 : index
    %c0_0 = arith.constant 0 : index
    %0 = vector.load %arg1[%c0, %c0_0] : memref<32x128xf32, #tpu.memory_space<vmem>>, vector<32x128xf32>
    %1 = arith.truncf %0 : vector<32x128xf32> to vector<32x128xbf16>
    %c0_1 = arith.constant 0 : index
    %c0_2 = arith.constant 0 : index
    %2 = vector.load %arg2[%c0_1, %c0_2] : memref<256x32xbf16, #tpu.memory_space<vmem>>, vector<256x32xbf16>
    %cst = arith.constant dense<0.000000e+00> : vector<256x128xf32>
    %3 = tpu.matmul %2, %1, %cst {dimension_numbers = #tpu.dot_dimension_numbers<[1], [0], [0], [1], [0, 0, 1, 1], [], []>} : vector<256x32xbf16>, vector<32x128xbf16>, vector<256x128xf32> -> vector<256x128xf32>
    %c0_3 = arith.constant 0 : index
    %c0_4 = arith.constant 0 : index
    %4 = vector.load %arg3[%c0_3, %c0_4] : memref<256x1xf32, #tpu.memory_space<vmem>>, vector<256x1xf32>
    %5 = vector.broadcast %4 : vector<256x1xf32> to vector<256x128xf32>
    %6 = arith.addf %3, %5 : vector<256x128xf32>
    %cst_5 = arith.constant 0.000000e+00 : f32
    %7 = vector.broadcast %cst_5 : f32 to vector<256x128xf32>
    %8 = arith.maximumf %6, %7 : vector<256x128xf32>
    %c0_6 = arith.constant 0 : index
    %c0_7 = arith.constant 0 : index
    %9 = vector.load %arg4[%c0_6, %c0_7] : memref<128x256xbf16, #tpu.memory_space<vmem>>, vector<128x256xbf16>
    %10 = arith.truncf %8 : vector<256x128xf32> to vector<256x128xbf16>
    %cst_8 = arith.constant dense<0.000000e+00> : vector<128x128xf32>
    %11 = tpu.matmul %9, %10, %cst_8 {dimension_numbers = #tpu.dot_dimension_numbers<[1], [0], [0], [1], [0, 0, 1, 1], [], []>} : vector<128x256xbf16>, vector<256x128xbf16>, vector<128x128xf32> -> vector<128x128xf32>
    %c0_9 = arith.constant 0 : index
    %c0_10 = arith.constant 0 : index
    %12 = vector.load %arg5[%c0_9, %c0_10] : memref<128x1xf32, #tpu.memory_space<vmem>>, vector<128x1xf32>
    %13 = vector.broadcast %12 : vector<128x1xf32> to vector<128x128xf32>
    %14 = arith.addf %11, %13 : vector<128x128xf32>
    %cst_11 = arith.constant 0.000000e+00 : f32
    %15 = vector.broadcast %cst_11 : f32 to vector<128x128xf32>
    %16 = arith.maximumf %14, %15 : vector<128x128xf32>
    %c0_12 = arith.constant 0 : index
    %c0_13 = arith.constant 0 : index
    %17 = vector.load %arg6[%c0_12, %c0_13] : memref<64x128xbf16, #tpu.memory_space<vmem>>, vector<64x128xbf16>
    %18 = arith.truncf %16 : vector<128x128xf32> to vector<128x128xbf16>
    %cst_14 = arith.constant dense<0.000000e+00> : vector<64x128xf32>
    %19 = tpu.matmul %17, %18, %cst_14 {dimension_numbers = #tpu.dot_dimension_numbers<[1], [0], [0], [1], [0, 0, 1, 1], [], []>} : vector<64x128xbf16>, vector<128x128xbf16>, vector<64x128xf32> -> vector<64x128xf32>
    %c0_15 = arith.constant 0 : index
    %c0_16 = arith.constant 0 : index
    %20 = vector.load %arg7[%c0_15, %c0_16] : memref<64x1xf32, #tpu.memory_space<vmem>>, vector<64x1xf32>
    %21 = vector.broadcast %20 : vector<64x1xf32> to vector<64x128xf32>
    %22 = arith.addf %19, %21 : vector<64x128xf32>
    %cst_17 = arith.constant 0.000000e+00 : f32
    %23 = vector.broadcast %cst_17 : f32 to vector<64x128xf32>
    %24 = arith.maximumf %22, %23 : vector<64x128xf32>
    %c0_18 = arith.constant 0 : index
    %c0_19 = arith.constant 0 : index
    %25 = vector.load %arg8[%c0_18, %c0_19] : memref<64x1xf32, #tpu.memory_space<vmem>>, vector<64x1xf32>
    %26 = vector.broadcast %25 : vector<64x1xf32> to vector<64x128xf32>
    %27 = arith.mulf %24, %26 : vector<64x128xf32>
    %cst_20 = arith.constant dense<0.000000e+00> : vector<128xf32>
    %28 = vector.multi_reduction <add>, %27, %cst_20 [0] : vector<64x128xf32> to vector<128xf32>
    %29 = vector.shape_cast %28 : vector<128xf32> to vector<1x128xf32>
    %c0_21 = arith.constant 0 : index
    %c0_22 = arith.constant 0 : index
    %30 = vector.load %arg9[%c0_21, %c0_22] : memref<1x1xf32, #tpu.memory_space<vmem>>, vector<1x1xf32>
    %31 = vector.broadcast %30 : vector<1x1xf32> to vector<1x128xf32>
    %32 = arith.addf %29, %31 : vector<1x128xf32>
    %c0_23 = arith.constant 0 : index
    %c0_24 = arith.constant 0 : index
    %33 = vector.load %arg10[%c0_23, %c0_24] : memref<1x128xf32, #tpu.memory_space<vmem>>, vector<1x128xf32>
    tpu.vector_store %arg10[%c0_23, %c0_24], %32 {strides = array<i32>} : memref<1x128xf32, #tpu.memory_space<vmem>>, vector<1x128xf32>,
    return
  }
  func.func @transform_0(%arg0: i32) -> (i32, i32) {
    %c0_i32 = arith.constant 0 : i32
    %c0_i32_0 = arith.constant 0 : i32
    return %c0_i32, %arg0 : i32, i32
  }
  func.func @transform_1(%arg0: i32) -> (i32, i32) {
    %c0_i32 = arith.constant 0 : i32
    %c0_i32_0 = arith.constant 0 : i32
    %c0_i32_1 = arith.constant 0 : i32
    return %c0_i32, %c0_i32_0 : i32, i32
  }
  func.func @transform_2(%arg0: i32) -> (i32, i32) {
    %c0_i32 = arith.constant 0 : i32
    %c0_i32_0 = arith.constant 0 : i32
    %c0_i32_1 = arith.constant 0 : i32
    return %c0_i32, %c0_i32_0 : i32, i32
  }
  func.func @transform_3(%arg0: i32) -> (i32, i32) {
    %c0_i32 = arith.constant 0 : i32
    %c0_i32_0 = arith.constant 0 : i32
    %c0_i32_1 = arith.constant 0 : i32
    return %c0_i32, %c0_i32_0 : i32, i32
  }
  func.func @transform_4(%arg0: i32) -> (i32, i32) {
    %c0_i32 = arith.constant 0 : i32
    %c0_i32_0 = arith.constant 0 : i32
    %c0_i32_1 = arith.constant 0 : i32
    return %c0_i32, %c0_i32_0 : i32, i32
  }
  func.func @transform_5(%arg0: i32) -> (i32, i32) {
    %c0_i32 = arith.constant 0 : i32
    %c0_i32_0 = arith.constant 0 : i32
    %c0_i32_1 = arith.constant 0 : i32
    return %c0_i32, %c0_i32_0 : i32, i32
  }
  func.func @transform_6(%arg0: i32) -> (i32, i32) {
    %c0_i32 = arith.constant 0 : i32
    %c0_i32_0 = arith.constant 0 : i32
    %c0_i32_1 = arith.constant 0 : i32
    return %c0_i32, %c0_i32_0 : i32, i32
  }
  func.func @transform_7(%arg0: i32) -> (i32, i32) {
    %c0_i32 = arith.constant 0 : i32
    %c0_i32_0 = arith.constant 0 : i32
    %c0_i32_1 = arith.constant 0 : i32
    return %c0_i32, %c0_i32_0 : i32, i32
  }
  func.func @transform_8(%arg0: i32) -> (i32, i32) {
    %c0_i32 = arith.constant 0 : i32
    %c0_i32_0 = arith.constant 0 : i32
    %c0_i32_1 = arith.constant 0 : i32
    return %c0_i32, %c0_i32_0 : i32, i32
  }
  func.func @transform_9(%arg0: i32) -> (i32, i32) {
    %c0_i32 = arith.constant 0 : i32
    %c0_i32_0 = arith.constant 0 : i32
    return %c0_i32, %arg0 : i32, i32
  }
}

</mosaic_0001>

<llo_original>
// kernel: ndvi_mlp.1
$region0: #{ndvi_mlp.1}
  #allocation0 [shape = 'u32[]', space=smem, size = 0x4, offset = 0x4, fixed_abs, tag = 'smem constant byte address 0x4 - core index']
  #allocation1 [shape = 'u32[144,128]{1,0:T(1,128)}', space=vmem, size = 0x12000, scoped, tag = 'internal scratch']
  #allocation2 [shape = 'f32[1,1]{1,0:T(1,128)S(1)}', space=vmem, size = 0x200, scoped, tag = 'scoped memory for ndvi_mlp.1']
  %s0 = inlined_call_operand.vmem [shape: f32[32,128], index: 0, kind: input, shape index: {}]
  %s1 = inlined_call_operand.vmem [shape: bf16[256,32], index: 1, kind: input, shape index: {}]
  %s2 = inlined_call_operand.vmem [shape: f32[256,1], index: 2, kind: input, shape index: {}]
  %s3 = inlined_call_operand.vmem [shape: bf16[128,256], index: 3, kind: input, shape index: {}]
  %s4 = inlined_call_operand.vmem [shape: f32[128,1], index: 4, kind: input, shape index: {}]
  %s5 = inlined_call_operand.vmem [shape: bf16[64,128], index: 5, kind: input, shape index: {}]
  %s6 = inlined_call_operand.vmem [shape: f32[64,1], index: 6, kind: input, shape index: {}]
  %s7 = inlined_call_operand.vmem [shape: f32[64,1], index: 7, kind: input, shape index: {}]
  %s8 = inlined_call_operand.<no memory space> [shape: f32[1,1], index: 8, kind: input, shape index: {}]
  %s9 = inlined_call_operand.vmem [shape: f32[1,128], index: 9, kind: output, shape index: {}]
  %s10 = sld [smem:[#allocation0]]
  $region46: #{ndvi_mlp.1} parent=0
    _
  %s12 = ssub.s32 1, %s10
  %s13 = scalar_select 0, %s12, %s10
  %v14 = vstv %s8
  %15 = vst [vmem:[#allocation2] sm:$0x1] %v14
  // Predicated region
  $region2: #{ndvi_mlp.1} parent=0 // pred_check
    _
  $region3: #{ndvi_mlp.1} parent=0 // pred_check_branch
    %17 = sbr.rel (0) target = $region5
  $region4: #{ndvi_mlp.1} parent=0 // pred_region
    _
  $region5: #{ndvi_mlp.1} parent=0 // pred_fallthru
    _
  // Predicated region
  $region6: #{ndvi_mlp.1} parent=0 // pred_check
    _
  $region7: #{ndvi_mlp.1} parent=0 // pred_check_branch
    %19 = sbr.rel (0) target = $region9
  $region8: #{ndvi_mlp.1} parent=0 // pred_region
    _
  $region9: #{ndvi_mlp.1} parent=0 // pred_fallthru
    _
  // Predicated region
  $region10: #{ndvi_mlp.1} parent=0 // pred_check
    _
  $region11: #{ndvi_mlp.1} parent=0 // pred_check_branch
    %21 = sbr.rel (0) target = $region13
  $region12: #{ndvi_mlp.1} parent=0 // pred_region
    _
  $region13: #{ndvi_mlp.1} parent=0 // pred_fallthru
    _
  // Predicated region
  $region14: #{ndvi_mlp.1} parent=0 // pred_check
    _
  $region15: #{ndvi_mlp.1} parent=0 // pred_check_branch
    %23 = sbr.rel (0) target = $region17
  $region16: #{ndvi_mlp.1} parent=0 // pred_region
    _
  $region17: #{ndvi_mlp.1} parent=0 // pred_fallthru
    _
  // Predicated region
  $region18: #{ndvi_mlp.1} parent=0 // pred_check
    _
  $region19: #{ndvi_mlp.1} parent=0 // pred_check_branch
    %25 = sbr.rel (0) target = $region21
  $region20: #{ndvi_mlp.1} parent=0 // pred_region
    _
  $region21: #{ndvi_mlp.1} parent=0 // pred_fallthru
    _
  // Predicated region
  $region22: #{ndvi_mlp.1} parent=0 // pred_check
    _
  $region23: #{ndvi_mlp.1} parent=0 // pred_check_branch
    %27 = sbr.rel (0) target = $region25
  $region24: #{ndvi_mlp.1} parent=0 // pred_region
    _
  $region25: #{ndvi_mlp.1} parent=0 // pred_fallthru
    _
  // Predicated region
  $region26: #{ndvi_mlp.1} parent=0 // pred_check
    _
  $region27: #{ndvi_mlp.1} parent=0 // pred_check_branch
    %29 = sbr.rel (0) target = $region29
  $region28: #{ndvi_mlp.1} parent=0 // pred_region
    _
  $region29: #{ndvi_mlp.1} parent=0 // pred_fallthru
    _
  // Predicated region
  $region30: #{ndvi_mlp.1} parent=0 // pred_check
    _
  $region31: #{ndvi_mlp.1} parent=0 // pred_check_branch
    %31 = sbr.rel (0) target = $region33
  $region32: #{ndvi_mlp.1} parent=0 // pred_region
    _
  $region33: #{ndvi_mlp.1} parent=0 // pred_fallthru
    _
  // Predicated region
  $region34: #{ndvi_mlp.1} parent=0 // pred_check
    _
  $region35: #{ndvi_mlp.1} parent=0 // pred_check_branch
    %33 = sbr.rel (0) target = $region37
  $region36: #{ndvi_mlp.1} parent=0 // pred_region
    _
  $region37: #{ndvi_mlp.1} parent=0 // pred_fallthru
    _
  %v35 = vld [vmem:[%s0] sm:$0xff]
  %v36 = vld [vmem:[%s0 + $0x8] sm:$0xff]
  %v37 = vld [vmem:[%s0 + $0x10] sm:$0xff]
  %v38 = vld [vmem:[%s0 + $0x18] sm:$0xff]
  %v39 = vpack.c.bf16 %v36, %v35
  %v40 = vpack.c.bf16 %v38, %v37
  %v41 = vld [vmem:[%s1] sm:$0xf]
  %v42 = vld [vmem:[%s1 + $0x4] sm:$0xf]
  %v43 = vld [vmem:[%s1 + $0x8] sm:$0xf]
  %v44 = vld [vmem:[%s1 + $0xc] sm:$0xf]
  %v45 = vld [vmem:[%s1 + $0x10] sm:$0xf]
  %v46 = vld [vmem:[%s1 + $0x14] sm:$0xf]
  %v47 = vld [vmem:[%s1 + $0x18] sm:$0xf]
  %v48 = vld [vmem:[%s1 + $0x1c] sm:$0xf]
  %v49 = vld [vmem:[%s1 + $0x20] sm:$0xf]
  %v50 = vld [vmem:[%s1 + $0x24] sm:$0xf]
  %v51 = vld [vmem:[%s1 + $0x28] sm:$0xf]
  %v52 = vld [vmem:[%s1 + $0x2c] sm:$0xf]
  %v53 = vld [vmem:[%s1 + $0x30] sm:$0xf]
  %v54 = vld [vmem:[%s1 + $0x34] sm:$0xf]
  %v55 = vld [vmem:[%s1 + $0x38] sm:$0xf]
  %v56 = vld [vmem:[%s1 + $0x3c] sm:$0xf]
  %v57 = vld [vmem:[%s1 + $0x40] sm:$0xf]
  %v58 = vld [vmem:[%s1 + $0x44] sm:$0xf]
  %v59 = vld [vmem:[%s1 + $0x48] sm:$0xf]
  %v60 = vld [vmem:[%s1 + $0x4c] sm:$0xf]
  %v61 = vld [vmem:[%s1 + $0x50] sm:$0xf]
  %v62 = vld [vmem:[%s1 + $0x54] sm:$0xf]
  %v63 = vld [vmem:[%s1 + $0x58] sm:$0xf]
  %v64 = vld [vmem:[%s1 + $0x5c] sm:$0xf]
  %v65 = vld [vmem:[%s1 + $0x60] sm:$0xf]
  %v66 = vld [vmem:[%s1 + $0x64] sm:$0xf]
  %v67 = vld [vmem:[%s1 + $0x68] sm:$0xf]
  %v68 = vld [vmem:[%s1 + $0x6c] sm:$0xf]
  %v69 = vld [vmem:[%s1 + $0x70] sm:$0xf]
  %v70 = vld [vmem:[%s1 + $0x74] sm:$0xf]
  %v71 = vld [vmem:[%s1 + $0x78] sm:$0xf]
  %v72 = vld [vmem:[%s1 + $0x7c] sm:$0xf]
  %v73 = vld [vmem:[%s2] sm:$0xff]
  %v74 = vld [vmem:[%s2 + $0x8] sm:$0xff]
  %v75 = vld [vmem:[%s2 + $0x10] sm:$0xff]
  %v76 = vld [vmem:[%s2 + $0x18] sm:$0xff]
  %v77 = vld [vmem:[%s2 + $0x20] sm:$0xff]
  %v78 = vld [vmem:[%s2 + $0x28] sm:$0xff]
  %v79 = vld [vmem:[%s2 + $0x30] sm:$0xff]
  %v80 = vld [vmem:[%s2 + $0x38] sm:$0xff]
  %v81 = vld [vmem:[%s2 + $0x40] sm:$0xff]
  %v82 = vld [vmem:[%s2 + $0x48] sm:$0xff]
  %v83 = vld [vmem:[%s2 + $0x50] sm:$0xff]
  %v84 = vld [vmem:[%s2 + $0x58] sm:$0xff]
  %v85 = vld [vmem:[%s2 + $0x60] sm:$0xff]
  %v86 = vld [vmem:[%s2 + $0x68] sm:$0xff]
  %v87 = vld [vmem:[%s2 + $0x70] sm:$0xff]
  %v88 = vld [vmem:[%s2 + $0x78] sm:$0xff]
  %v89 = vld [vmem:[%s2 + $0x80] sm:$0xff]
  %v90 = vld [vmem:[%s2 + $0x88] sm:$0xff]
  %v91 = vld [vmem:[%s2 + $0x90] sm:$0xff]
  %v92 = vld [vmem:[%s2 + $0x98] sm:$0xff]
  %v93 = vld [vmem:[%s2 + $0xa0] sm:$0xff]
  %v94 = vld [vmem:[%s2 + $0xa8] sm:$0xff]
  %v95 = vld [vmem:[%s2 + $0xb0] sm:$0xff]
  %v96 = vld [vmem:[%s2 + $0xb8] sm:$0xff]
  %v97 = vld [vmem:[%s2 + $0xc0] sm:$0xff]
  %v98 = vld [vmem:[%s2 + $0xc8] sm:$0xff]
  %v99 = vld [vmem:[%s2 + $0xd0] sm:$0xff]
  %v100 = vld [vmem:[%s2 + $0xd8] sm:$0xff]
  %v101 = vld [vmem:[%s2 + $0xe0] sm:$0xff]
  %v102 = vld [vmem:[%s2 + $0xe8] sm:$0xff]
  %v103 = vld [vmem:[%s2 + $0xf0] sm:$0xff]
  %v104 = vld [vmem:[%s2 + $0xf8] sm:$0xff]
  %106 = vset.pattern.permute.xlu0 0
  %107 = vperm.xlu0 %106, %v73
  %v108 = vpop.permute.xlu0 %107
  %111 = vset.pattern.permute.xlu0 0
  %112 = vperm.xlu0 %111, %v74
  %v113 = vpop.permute.xlu0 %112
  %116 = vset.pattern.permute.xlu0 0
  %117 = vperm.xlu0 %116, %v75
  %v118 = vpop.permute.xlu0 %117
  %121 = vset.pattern.permute.xlu0 0
  %122 = vperm.xlu0 %121, %v76
  %v123 = vpop.permute.xlu0 %122
  %126 = vset.pattern.permute.xlu0 0
  %127 = vperm.xlu0 %126, %v77
  %v128 = vpop.permute.xlu0 %127
  %131 = vset.pattern.permute.xlu0 0
  %132 = vperm.xlu0 %131, %v78
  %v133 = vpop.permute.xlu0 %132
  %136 = vset.pattern.permute.xlu0 0
  %137 = vperm.xlu0 %136, %v79
  %v138 = vpop.permute.xlu0 %137
  %141 = vset.pattern.permute.xlu0 0
  %142 = vperm.xlu0 %141, %v80
  %v143 = vpop.permute.xlu0 %142
  %146 = vset.pattern.permute.xlu0 0
  %147 = vperm.xlu0 %146, %v81
  %v148 = vpop.permute.xlu0 %147
  %151 = vset.pattern.permute.xlu0 0
  %152 = vperm.xlu0 %151, %v82
  %v153 = vpop.permute.xlu0 %152
  %156 = vset.pattern.permute.xlu0 0
  %157 = vperm.xlu0 %156, %v83
  %v158 = vpop.permute.xlu0 %157
  %161 = vset.pattern.permute.xlu0 0
  %162 = vperm.xlu0 %161, %v84
  %v163 = vpop.permute.xlu0 %162
  %166 = vset.pattern.permute.xlu0 0
  %167 = vperm.xlu0 %166, %v85
  %v168 = vpop.permute.xlu0 %167
  %171 = vset.pattern.permute.xlu0 0
  %172 = vperm.xlu0 %171, %v86
  %v173 = vpop.permute.xlu0 %172
  %176 = vset.pattern.permute.xlu0 0
  %177 = vperm.xlu0 %176, %v87
  %v178 = vpop.permute.xlu0 %177
  %181 = vset.pattern.permute.xlu0 0
  %182 = vperm.xlu0 %181, %v88
  %v183 = vpop.permute.xlu0 %182
  %186 = vset.pattern.permute.xlu0 0
  %187 = vperm.xlu0 %186, %v89
  %v188 = vpop.permute.xlu0 %187
  %191 = vset.pattern.permute.xlu0 0
  %192 = vperm.xlu0 %191, %v90
  %v193 = vpop.permute.xlu0 %192
  %196 = vset.pattern.permute.xlu0 0
  %197 = vperm.xlu0 %196, %v91
  %v198 = vpop.permute.xlu0 %197
  %201 = vset.pattern.permute.xlu0 0
  %202 = vperm.xlu0 %201, %v92
  %v203 = vpop.permute.xlu0 %202
  %206 = vset.pattern.permute.xlu0 0
  %207 = vperm.xlu0 %206, %v93
  %v208 = vpop.permute.xlu0 %207
  %211 = vset.pattern.permute.xlu0 0
  %212 = vperm.xlu0 %211, %v94
  %v213 = vpop.permute.xlu0 %212
  %216 = vset.pattern.permute.xlu0 0
  %217 = vperm.xlu0 %216, %v95
  %v218 = vpop.permute.xlu0 %217
  %221 = vset.pattern.permute.xlu0 0
  %222 = vperm.xlu0 %221, %v96
  %v223 = vpop.permute.xlu0 %222
  %226 = vset.pattern.permute.xlu0 0
  %227 = vperm.xlu0 %226, %v97
  %v228 = vpop.permute.xlu0 %227
  %231 = vset.pattern.permute.xlu0 0
  %232 = vperm.xlu0 %231, %v98
  %v233 = vpop.permute.xlu0 %232
  %236 = vset.pattern.permute.xlu0 0
  %237 = vperm.xlu0 %236, %v99
  %v238 = vpop.permute.xlu0 %237
  %241 = vset.pattern.permute.xlu0 0
  %242 = vperm.xlu0 %241, %v100
  %v243 = vpop.permute.xlu0 %242
  %246 = vset.pattern.permute.xlu0 0
  %247 = vperm.xlu0 %246, %v101
  %v248 = vpop.permute.xlu0 %247
  %251 = vset.pattern.permute.xlu0 0
  %252 = vperm.xlu0 %251, %v102
  %v253 = vpop.permute.xlu0 %252
  %256 = vset.pattern.permute.xlu0 0
  %257 = vperm.xlu0 %256, %v103
  %v258 = vpop.permute.xlu0 %257
  %261 = vset.pattern.permute.xlu0 0
  %262 = vperm.xlu0 %261, %v104
  %v263 = vpop.permute.xlu0 %262
  %v297 = vunpack.c.l.b16 %v41
  %v298 = vunpack.c.l.b16 %v42
  %v299 = vunpack.c.l.b16 %v43
  %v300 = vunpack.c.l.b16 %v44
  %v301 = vunpack.c.l.b16 %v45
  %v302 = vunpack.c.l.b16 %v46
  %v303 = vunpack.c.l.b16 %v47
  %v304 = vunpack.c.l.b16 %v48
  %v305 = vunpack.c.l.b16 %v49
  %v306 = vunpack.c.l.b16 %v50
  %v307 = vunpack.c.l.b16 %v51
  %v308 = vunpack.c.l.b16 %v52
  %v309 = vunpack.c.l.b16 %v53
  %v310 = vunpack.c.l.b16 %v54
  %v311 = vunpack.c.l.b16 %v55
  %v312 = vunpack.c.l.b16 %v56
  %v313 = vunpack.c.l.b16 %v57
  %v314 = vunpack.c.l.b16 %v58
  %v315 = vunpack.c.l.b16 %v59
  %v316 = vunpack.c.l.b16 %v60
  %v317 = vunpack.c.l.b16 %v61
  %v318 = vunpack.c.l.b16 %v62
  %v319 = vunpack.c.l.b16 %v63
  %v320 = vunpack.c.l.b16 %v64
  %v321 = vunpack.c.l.b16 %v65
  %v322 = vunpack.c.l.b16 %v66
  %v323 = vunpack.c.l.b16 %v67
  %v324 = vunpack.c.l.b16 %v68
  %v325 = vunpack.c.l.b16 %v69
  %v326 = vunpack.c.l.b16 %v70
  %v327 = vunpack.c.l.b16 %v71
  %v328 = vunpack.c.l.b16 %v72
  %v329 = vpack.c.b16 %v298, %v297
  %v330 = vpack.c.b16 %v300, %v299
  %v331 = vpack.c.b16 %v302, %v301
  %v332 = vpack.c.b16 %v304, %v303
  %v333 = vpack.c.b16 %v306, %v305
  %v334 = vpack.c.b16 %v308, %v307
  %v335 = vpack.c.b16 %v310, %v309
  %v336 = vpack.c.b16 %v312, %v311
  %v337 = vpack.c.b16 %v314, %v313
  %v338 = vpack.c.b16 %v316, %v315
  %v339 = vpack.c.b16 %v318, %v317
  %v340 = vpack.c.b16 %v320, %v319
  %v341 = vpack.c.b16 %v322, %v321
  %v342 = vpack.c.b16 %v324, %v323
  %v343 = vpack.c.b16 %v326, %v325
  %v344 = vpack.c.b16 %v328, %v327
  %vm345 = vcmask 261120
  %v347 = vsel %vm345, %v329, 0
  %v350 = vsel %vm345, %v330, 0
  %v353 = vsel %vm345, %v331, 0
  %v356 = vsel %vm345, %v332, 0
  %v359 = vsel %vm345, %v333, 0
  %v362 = vsel %vm345, %v334, 0
  %v365 = vsel %vm345, %v335, 0
  %v368 = vsel %vm345, %v336, 0
  %v371 = vsel %vm345, %v337, 0
  %v374 = vsel %vm345, %v338, 0
  %v377 = vsel %vm345, %v339, 0
  %v380 = vsel %vm345, %v340, 0
  %v383 = vsel %vm345, %v341, 0
  %v386 = vsel %vm345, %v342, 0
  %v389 = vsel %vm345, %v343, 0
  %v392 = vsel %vm345, %v344, 0
  %394 = vmatprep.subr.bf16.mxu0 0
  %395 = vmatpush1.bf16.msra.mxu0 %v39
  %396 = vmatprep.subr.bf16.mxu0 0
  %397 = vmatpush1.bf16.msra.mxu0 %v40
  %398 = vmatprep.subr.bf16.mxu0 0
  %399 = vmatpush1.bf16.msra.mxu0 0
  %400 = vmatprep.subr.bf16.mxu0 0
  %401 = vmatpush1.bf16.msra.mxu0 0
  %402 = vmatprep.subr.bf16.mxu0 0
  %403 = vmatpush1.bf16.msra.mxu0 0
  %404 = vmatprep.subr.bf16.mxu0 0
  %405 = vmatpush1.bf16.msra.mxu0 0
  %406 = vmatprep.subr.bf16.mxu0 0
  %407 = vmatpush1.bf16.msra.mxu0 0
  %408 = vmatprep.subr.bf16.mxu0 0
  %409 = vmatpush1.bf16.msra.mxu0 0
  %410 = vmatprep.subr.bf16.mxu0 0
  %411 = vmatpush1.bf16.msra.mxu0 0
  %412 = vmatprep.subr.bf16.mxu0 0
  %413 = vmatpush1.bf16.msra.mxu0 0
  %414 = vmatprep.subr.bf16.mxu0 0
  %415 = vmatpush1.bf16.msra.mxu0 0
  %416 = vmatprep.subr.bf16.mxu0 0
  %417 = vmatpush1.bf16.msra.mxu0 0
  %418 = vmatprep.subr.bf16.mxu0 0
  %419 = vmatpush1.bf16.msra.mxu0 0
  %420 = vmatprep.subr.bf16.mxu0 0
  %421 = vmatpush1.bf16.msra.mxu0 0
  %422 = vmatprep.subr.bf16.mxu0 0
  %423 = vmatpush1.bf16.msra.mxu0 0
  %424 = vmatprep.subr.bf16.mxu0 0
  %425 = vmatpush1.bf16.msra.mxu0 0
  %426 = vmatprep.mubr.bf16.mxu0 0
  %427 = vmatmul.mubr.bf16.gmra.mrb[0].mxu0 %v347
  %v428 = vpop.f32.mrb[0].mxu0
  %v429 = vadd.f32 %v108, %v428
  %v430 = vpop.f32.mrb[0].mxu0
  %v431 = vpop.f32.mrb[0].mxu0
  %v432 = vadd.f32 %v113, %v431
  %v433 = vpop.f32.mrb[0].mxu0
  %434 = vmatprep.mubr.bf16.mxu0 0
  %435 = vmatmul.mubr.bf16.gmra.mrb[0].mxu0 %v350
  %v436 = vpop.f32.mrb[0].mxu0
  %v437 = vadd.f32 %v118, %v436
  %v438 = vpop.f32.mrb[0].mxu0
  %v439 = vpop.f32.mrb[0].mxu0
  %v440 = vadd.f32 %v123, %v439
  %v441 = vpop.f32.mrb[0].mxu0
  %442 = vmatprep.mubr.bf16.mxu0 0
  %443 = vmatmul.mubr.bf16.gmra.mrb[0].mxu0 %v353
  %v444 = vpop.f32.mrb[0].mxu0
  %v445 = vadd.f32 %v128, %v444
  %v446 = vpop.f32.mrb[0].mxu0
  %v447 = vpop.f32.mrb[0].mxu0
  %v448 = vadd.f32 %v133, %v447
  %v449 = vpop.f32.mrb[0].mxu0
  %450 = vmatprep.mubr.bf16.mxu0 0
  %451 = vmatmul.mubr.bf16.gmra.mrb[0].mxu0 %v356
  %v452 = vpop.f32.mrb[0].mxu0
  %v453 = vadd.f32 %v138, %v452
  %v454 = vpop.f32.mrb[0].mxu0
  %v455 = vpop.f32.mrb[0].mxu0
  %v456 = vadd.f32 %v143, %v455
  %v457 = vpop.f32.mrb[0].mxu0
  %458 = vmatprep.mubr.bf16.mxu0 0
  %459 = vmatmul.mubr.bf16.gmra.mrb[0].mxu0 %v359
  %v460 = vpop.f32.mrb[0].mxu0
  %v461 = vadd.f32 %v148, %v460
  %v462 = vpop.f32.mrb[0].mxu0
  %v463 = vpop.f32.mrb[0].mxu0
  %v464 = vadd.f32 %v153, %v463
  %v465 = vpop.f32.mrb[0].mxu0
  %466 = vmatprep.mubr.bf16.mxu0 0
  %467 = vmatmul.mubr.bf16.gmra.mrb[0].mxu0 %v362
  %v468 = vpop.f32.mrb[0].mxu0
  %v469 = vadd.f32 %v158, %v468
  %v470 = vpop.f32.mrb[0].mxu0
  %v471 = vpop.f32.mrb[0].mxu0
  %v472 = vadd.f32 %v163, %v471
  %v473 = vpop.f32.mrb[0].mxu0
  %474 = vmatprep.mubr.bf16.mxu0 0
  %475 = vmatmul.mubr.bf16.gmra.mrb[0].mxu0 %v365
  %v476 = vpop.f32.mrb[0].mxu0
  %v477 = vadd.f32 %v168, %v476
  %v478 = vpop.f32.mrb[0].mxu0
  %v479 = vpop.f32.mrb[0].mxu0
  %v480 = vadd.f32 %v173, %v479
  %v481 = vpop.f32.mrb[0].mxu0
  %482 = vmatprep.mubr.bf16.mxu0 0
  %483 = vmatmul.mubr.bf16.gmra.mrb[0].mxu0 %v368
  %v484 = vpop.f32.mrb[0].mxu0
  %v485 = vadd.f32 %v178, %v484
  %v486 = vpop.f32.mrb[0].mxu0
  %v487 = vpop.f32.mrb[0].mxu0
  %v488 = vadd.f32 %v183, %v487
  %v489 = vpop.f32.mrb[0].mxu0
  %490 = vmatprep.mubr.bf16.mxu0 0
  %491 = vmatmul.mubr.bf16.gmra.mrb[0].mxu0 %v371
  %v492 = vpop.f32.mrb[0].mxu0
  %v493 = vadd.f32 %v188, %v492
  %v494 = vpop.f32.mrb[0].mxu0
  %v495 = vpop.f32.mrb[0].mxu0
  %v496 = vadd.f32 %v193, %v495
  %v497 = vpop.f32.mrb[0].mxu0
  %498 = vmatprep.mubr.bf16.mxu0 0
  %499 = vmatmul.mubr.bf16.gmra.mrb[0].mxu0 %v374
  %v500 = vpop.f32.mrb[0].mxu0
  %v501 = vadd.f32 %v198, %v500
  %v502 = vpop.f32.mrb[0].mxu0
  %v503 = vpop.f32.mrb[0].mxu0
  %v504 = vadd.f32 %v203, %v503
  %v505 = vpop.f32.mrb[0].mxu0
  %506 = vmatprep.mubr.bf16.mxu0 0
  %507 = vmatmul.mubr.bf16.gmra.mrb[0].mxu0 %v377
  %v508 = vpop.f32.mrb[0].mxu0
  %v509 = vadd.f32 %v208, %v508
  %v510 = vpop.f32.mrb[0].mxu0
  %v511 = vpop.f32.mrb[0].mxu0
  %v512 = vadd.f32 %v213, %v511
  %v513 = vpop.f32.mrb[0].mxu0
  %514 = vmatprep.mubr.bf16.mxu0 0
  %515 = vmatmul.mubr.bf16.gmra.mrb[0].mxu0 %v380
  %v516 = vpop.f32.mrb[0].mxu0
  %v517 = vadd.f32 %v218, %v516
  %v518 = vpop.f32.mrb[0].mxu0
  %v519 = vpop.f32.mrb[0].mxu0
  %v520 = vadd.f32 %v223, %v519
  %v521 = vpop.f32.mrb[0].mxu0
  %522 = vmatprep.mubr.bf16.mxu0 0
  %523 = vmatmul.mubr.bf16.gmra.mrb[0].mxu0 %v383
  %v524 = vpop.f32.mrb[0].mxu0
  %v525 = vadd.f32 %v228, %v524
  %v526 = vpop.f32.mrb[0].mxu0
  %v527 = vpop.f32.mrb[0].mxu0
  %v528 = vadd.f32 %v233, %v527
  %v529 = vpop.f32.mrb[0].mxu0
  %530 = vmatprep.mubr.bf16.mxu0 0
  %531 = vmatmul.mubr.bf16.gmra.mrb[0].mxu0 %v386
  %v532 = vpop.f32.mrb[0].mxu0
  %v533 = vadd.f32 %v238, %v532
  %v534 = vpop.f32.mrb[0].mxu0
  %v535 = vpop.f32.mrb[0].mxu0
  %v536 = vadd.f32 %v243, %v535
  %v537 = vpop.f32.mrb[0].mxu0
  %538 = vmatprep.mubr.bf16.mxu0 0
  %539 = vmatmul.mubr.bf16.gmra.mrb[0].mxu0 %v389
  %v540 = vpop.f32.mrb[0].mxu0
  %v541 = vadd.f32 %v248, %v540
  %v542 = vpop.f32.mrb[0].mxu0
  %v543 = vpop.f32.mrb[0].mxu0
  %v544 = vadd.f32 %v253, %v543
  %v545 = vpop.f32.mrb[0].mxu0
  %546 = vmatprep.mubr.bf16.mxu0 0
  %547 = vmatmul.mubr.bf16.gmra.mrb[0].mxu0 %v392
  %v548 = vpop.f32.mrb[0].mxu0
  %v549 = vadd.f32 %v258, %v548
  %v550 = vpop.f32.mrb[0].mxu0
  %v551 = vpop.f32.mrb[0].mxu0
  %v552 = vadd.f32 %v263, %v551
  %v553 = vpop.f32.mrb[0].mxu0
  %554 = vdwg.mxu0
  %v555 = vmax.f32 %v429, 0.0
  %v556 = vmax.f32 %v432, 0.0
  %v557 = vmax.f32 %v437, 0.0
  %v558 = vmax.f32 %v440, 0.0
  %v559 = vmax.f32 %v445, 0.0
  %v560 = vmax.f32 %v448, 0.0
  %v561 = vmax.f32 %v453, 0.0
  %v562 = vmax.f32 %v456, 0.0
  %v563 = vmax.f32 %v461, 0.0
  %v564 = vmax.f32 %v464, 0.0
  %v565 = vmax.f32 %v469, 0.0
  %v566 = vmax.f32 %v472, 0.0
  %v567 = vmax.f32 %v477, 0.0
  %v568 = vmax.f32 %v480, 0.0
  %v569 = vmax.f32 %v485, 0.0
  %v570 = vmax.f32 %v488, 0.0
  %v571 = vmax.f32 %v493, 0.0
  %v572 = vmax.f32 %v496, 0.0
  %v573 = vmax.f32 %v501, 0.0
  %v574 = vmax.f32 %v504, 0.0
  %v575 = vmax.f32 %v509, 0.0
  %v576 = vmax.f32 %v512, 0.0
  %v577 = vmax.f32 %v517, 0.0
  %v578 = vmax.f32 %v520, 0.0
  %v579 = vmax.f32 %v525, 0.0
  %v580 = vmax.f32 %v528, 0.0
  %v581 = vmax.f32 %v533, 0.0
  %v582 = vmax.f32 %v536, 0.0
  %v583 = vmax.f32 %v541, 0.0
  %v584 = vmax.f32 %v544, 0.0
  %v585 = vmax.f32 %v549, 0.0
  %v586 = vmax.f32 %v552, 0.0
  %v587 = vld [vmem:[%s3] sm:$0xff]
  %v588 = vld [vmem:[%s3 + $0x8] sm:$0xff]
  %v589 = vld [vmem:[%s3 + $0x10] sm:$0xff]
  %v590 = vld [vmem:[%s3 + $0x18] sm:$0xff]
  %v591 = vld [vmem:[%s3 + $0x20] sm:$0xff]
  %v592 = vld [vmem:[%s3 + $0x28] sm:$0xff]
  %v593 = vld [vmem:[%s3 + $0x30] sm:$0xff]
  %v594 = vld [vmem:[%s3 + $0x38] sm:$0xff]
  %v595 = vld [vmem:[%s3 + $0x40] sm:$0xff]
  %v596 = vld [vmem:[%s3 + $0x48] sm:$0xff]
  %v597 = vld [vmem:[%s3 + $0x50] sm:$0xff]
  %v598 = vld [vmem:[%s3 + $0x58] sm:$0xff]
  %v599 = vld [vmem:[%s3 + $0x60] sm:$0xff]
  %v600 = vld [vmem:[%s3 + $0x68] sm:$0xff]
  %v601 = vld [vmem:[%s3 + $0x70] sm:$0xff]
  %v602 = vld [vmem:[%s3 + $0x78] sm:$0xff]
  %v603 = vpack.c.bf16 %v556, %v555
  %v604 = vpack.c.bf16 %v558, %v557
  %v605 = vpack.c.bf16 %v560, %v559
  %v606 = vpack.c.bf16 %v562, %v561
  %v607 = vpack.c.bf16 %v564, %v563
  %v608 = vpack.c.bf16 %v566, %v565
  %v609 = vpack.c.bf16 %v568, %v567
  %v610 = vpack.c.bf16 %v570, %v569
  %v611 = vpack.c.bf16 %v572, %v571
  %v612 = vpack.c.bf16 %v574, %v573
  %v613 = vpack.c.bf16 %v576, %v575
  %v614 = vpack.c.bf16 %v578, %v577
  %v615 = vpack.c.bf16 %v580, %v579
  %v616 = vpack.c.bf16 %v582, %v581
  %v617 = vpack.c.bf16 %v584, %v583
  %v618 = vpack.c.bf16 %v586, %v585
  %v619 = vld [vmem:[%s4] sm:$0xff]
  %v620 = vld [vmem:[%s4 + $0x8] sm:$0xff]
  %v621 = vld [vmem:[%s4 + $0x10] sm:$0xff]
  %v622 = vld [vmem:[%s4 + $0x18] sm:$0xff]
  %v623 = vld [vmem:[%s4 + $0x20] sm:$0xff]
  %v624 = vld [vmem:[%s4 + $0x28] sm:$0xff]
  %v625 = vld [vmem:[%s4 + $0x30] sm:$0xff]
  %v626 = vld [vmem:[%s4 + $0x38] sm:$0xff]
  %v627 = vld [vmem:[%s4 + $0x40] sm:$0xff]
  %v628 = vld [vmem:[%s4 + $0x48] sm:$0xff]
  %v629 = vld [vmem:[%s4 + $0x50] sm:$0xff]
  %v630 = vld [vmem:[%s4 + $0x58] sm:$0xff]
  %v631 = vld [vmem:[%s4 + $0x60] sm:$0xff]
  %v632 = vld [vmem:[%s4 + $0x68] sm:$0xff]
  %v633 = vld [vmem:[%s4 + $0x70] sm:$0xff]
  %v634 = vld [vmem:[%s4 + $0x78] sm:$0xff]
  %636 = vset.pattern.permute.xlu0 0
  %637 = vperm.xlu0 %636, %v619
  %v638 = vpop.permute.xlu0 %637
  %641 = vset.pattern.permute.xlu0 0
  %642 = vperm.xlu0 %641, %v620
  %v643 = vpop.permute.xlu0 %642
  %646 = vset.pattern.permute.xlu0 0
  %647 = vperm.xlu0 %646, %v621
  %v648 = vpop.permute.xlu0 %647
  %651 = vset.pattern.permute.xlu0 0
  %652 = vperm.xlu0 %651, %v622
  %v653 = vpop.permute.xlu0 %652
  %656 = vset.pattern.permute.xlu0 0
  %657 = vperm.xlu0 %656, %v623
  %v658 = vpop.permute.xlu0 %657
  %661 = vset.pattern.permute.xlu0 0
  %662 = vperm.xlu0 %661, %v624
  %v663 = vpop.permute.xlu0 %662
  %666 = vset.pattern.permute.xlu0 0
  %667 = vperm.xlu0 %666, %v625
  %v668 = vpop.permute.xlu0 %667
  %671 = vset.pattern.permute.xlu0 0
  %672 = vperm.xlu0 %671, %v626
  %v673 = vpop.permute.xlu0 %672
  %676 = vset.pattern.permute.xlu0 0
  %677 = vperm.xlu0 %676, %v627
  %v678 = vpop.permute.xlu0 %677
  %681 = vset.pattern.permute.xlu0 0
  %682 = vperm.xlu0 %681, %v628
  %v683 = vpop.permute.xlu0 %682
  %686 = vset.pattern.permute.xlu0 0
  %687 = vperm.xlu0 %686, %v629
  %v688 = vpop.permute.xlu0 %687
  %691 = vset.pattern.permute.xlu0 0
  %692 = vperm.xlu0 %691, %v630
  %v693 = vpop.permute.xlu0 %692
  %696 = vset.pattern.permute.xlu0 0
  %697 = vperm.xlu0 %696, %v631
  %v698 = vpop.permute.xlu0 %697
  %701 = vset.pattern.permute.xlu0 0
  %702 = vperm.xlu0 %701, %v632
  %v703 = vpop.permute.xlu0 %702
  %706 = vset.pattern.permute.xlu0 0
  %707 = vperm.xlu0 %706, %v633
  %v708 = vpop.permute.xlu0 %707
  %711 = vset.pattern.permute.xlu0 0
  %712 = vperm.xlu0 %711, %v634
  %v713 = vpop.permute.xlu0 %712
  %v731 = vunpack.c.l.b16 %v587
  %v732 = vunpack.c.h.b16 %v587
  %v733 = vunpack.c.l.b16 %v588
  %v734 = vunpack.c.h.b16 %v588
  %v735 = vunpack.c.l.b16 %v589
  %v736 = vunpack.c.h.b16 %v589
  %v737 = vunpack.c.l.b16 %v590
  %v738 = vunpack.c.h.b16 %v590
  %v739 = vunpack.c.l.b16 %v591
  %v740 = vunpack.c.h.b16 %v591
  %v741 = vunpack.c.l.b16 %v592
  %v742 = vunpack.c.h.b16 %v592
  %v743 = vunpack.c.l.b16 %v593
  %v744 = vunpack.c.h.b16 %v593
  %v745 = vunpack.c.l.b16 %v594
  %v746 = vunpack.c.h.b16 %v594
  %v747 = vunpack.c.l.b16 %v595
  %v748 = vunpack.c.h.b16 %v595
  %v749 = vunpack.c.l.b16 %v596
  %v750 = vunpack.c.h.b16 %v596
  %v751 = vunpack.c.l.b16 %v597
  %v752 = vunpack.c.h.b16 %v597
  %v753 = vunpack.c.l.b16 %v598
  %v754 = vunpack.c.h.b16 %v598
  %v755 = vunpack.c.l.b16 %v599
  %v756 = vunpack.c.h.b16 %v599
  %v757 = vunpack.c.l.b16 %v600
  %v758 = vunpack.c.h.b16 %v600
  %v759 = vunpack.c.l.b16 %v601
  %v760 = vunpack.c.h.b16 %v601
  %v761 = vunpack.c.l.b16 %v602
  %v762 = vunpack.c.h.b16 %v602
  %v763 = vpack.c.b16 %v733, %v731
  %v764 = vpack.c.b16 %v734, %v732
  %v765 = vpack.c.b16 %v737, %v735
  %v766 = vpack.c.b16 %v738, %v736
  %v767 = vpack.c.b16 %v741, %v739
  %v768 = vpack.c.b16 %v742, %v740
  %v769 = vpack.c.b16 %v745, %v743
  %v770 = vpack.c.b16 %v746, %v744
  %v771 = vpack.c.b16 %v749, %v747
  %v772 = vpack.c.b16 %v750, %v748
  %v773 = vpack.c.b16 %v753, %v751
  %v774 = vpack.c.b16 %v754, %v752
  %v775 = vpack.c.b16 %v757, %v755
  %v776 = vpack.c.b16 %v758, %v756
  %v777 = vpack.c.b16 %v761, %v759
  %v778 = vpack.c.b16 %v762, %v760
  %795 = vmatprep.subr.bf16.mxu0 0
  %796 = vmatpush1.bf16.msra.mxu0 %v603
  %797 = vmatprep.subr.bf16.mxu0 0
  %798 = vmatpush1.bf16.msra.mxu0 %v604
  %799 = vmatprep.subr.bf16.mxu0 0
  %800 = vmatpush1.bf16.msra.mxu0 %v605
  %801 = vmatprep.subr.bf16.mxu0 0
  %802 = vmatpush1.bf16.msra.mxu0 %v606
  %803 = vmatprep.subr.bf16.mxu0 0
  %804 = vmatpush1.bf16.msra.mxu0 %v607
  %805 = vmatprep.subr.bf16.mxu0 0
  %806 = vmatpush1.bf16.msra.mxu0 %v608
  %807 = vmatprep.subr.bf16.mxu0 0
  %808 = vmatpush1.bf16.msra.mxu0 %v609
  %809 = vmatprep.subr.bf16.mxu0 0
  %810 = vmatpush1.bf16.msra.mxu0 %v610
  %811 = vmatprep.subr.bf16.mxu0 0
  %812 = vmatpush1.bf16.msra.mxu0 %v611
  %813 = vmatprep.subr.bf16.mxu0 0
  %814 = vmatpush1.bf16.msra.mxu0 %v612
  %815 = vmatprep.subr.bf16.mxu0 0
  %816 = vmatpush1.bf16.msra.mxu0 %v613
  %817 = vmatprep.subr.bf16.mxu0 0
  %818 = vmatpush1.bf16.msra.mxu0 %v614
  %819 = vmatprep.subr.bf16.mxu0 0
  %820 = vmatpush1.bf16.msra.mxu0 %v615
  %821 = vmatprep.subr.bf16.mxu0 0
  %822 = vmatpush1.bf16.msra.mxu0 %v616
  %823 = vmatprep.subr.bf16.mxu0 0
  %824 = vmatpush1.bf16.msra.mxu0 %v617
  %825 = vmatprep.subr.bf16.mxu0 0
  %826 = vmatpush1.bf16.msra.mxu0 %v618
  %827 = vmatprep.mubr.bf16.mxu0 %v764
  %828 = vmatmul.mubr.bf16.gmra.mrb[0].mxu0 %v763
  %v829 = vpop.f32.mrb[0].mxu0
  %v830 = vadd.f32 %v638, %v829
  %v831 = vpop.f32.mrb[0].mxu0
  %v832 = vpop.f32.mrb[0].mxu0
  %v833 = vadd.f32 %v643, %v832
  %v834 = vpop.f32.mrb[0].mxu0
  %835 = vmatprep.mubr.bf16.mxu0 %v766
  %836 = vmatmul.mubr.bf16.gmra.mrb[0].mxu0 %v765
  %v837 = vpop.f32.mrb[0].mxu0
  %v838 = vadd.f32 %v648, %v837
  %v839 = vpop.f32.mrb[0].mxu0
  %v840 = vpop.f32.mrb[0].mxu0
  %v841 = vadd.f32 %v653, %v840
  %v842 = vpop.f32.mrb[0].mxu0
  %843 = vmatprep.mubr.bf16.mxu0 %v768
  %844 = vmatmul.mubr.bf16.gmra.mrb[0].mxu0 %v767
  %v845 = vpop.f32.mrb[0].mxu0
  %v846 = vadd.f32 %v658, %v845
  %v847 = vpop.f32.mrb[0].mxu0
  %v848 = vpop.f32.mrb[0].mxu0
  %v849 = vadd.f32 %v663, %v848
  %v850 = vpop.f32.mrb[0].mxu0
  %851 = vmatprep.mubr.bf16.mxu0 %v770
  %852 = vmatmul.mubr.bf16.gmra.mrb[0].mxu0 %v769
  %v853 = vpop.f32.mrb[0].mxu0
  %v854 = vadd.f32 %v668, %v853
  %v855 = vpop.f32.mrb[0].mxu0
  %v856 = vpop.f32.mrb[0].mxu0
  %v857 = vadd.f32 %v673, %v856
  %v858 = vpop.f32.mrb[0].mxu0
  %859 = vmatprep.mubr.bf16.mxu0 %v772
  %860 = vmatmul.mubr.bf16.gmra.mrb[0].mxu0 %v771
  %v861 = vpop.f32.mrb[0].mxu0
  %v862 = vadd.f32 %v678, %v861
  %v863 = vpop.f32.mrb[0].mxu0
  %v864 = vpop.f32.mrb[0].mxu0
  %v865 = vadd.f32 %v683, %v864
  %v866 = vpop.f32.mrb[0].mxu0
  %867 = vmatprep.mubr.bf16.mxu0 %v774
  %868 = vmatmul.mubr.bf16.gmra.mrb[0].mxu0 %v773
  %v869 = vpop.f32.mrb[0].mxu0
  %v870 = vadd.f32 %v688, %v869
  %v871 = vpop.f32.mrb[0].mxu0
  %v872 = vpop.f32.mrb[0].mxu0
  %v873 = vadd.f32 %v693, %v872
  %v874 = vpop.f32.mrb[0].mxu0
  %875 = vmatprep.mubr.bf16.mxu0 %v776
  %876 = vmatmul.mubr.bf16.gmra.mrb[0].mxu0 %v775
  %v877 = vpop.f32.mrb[0].mxu0
  %v878 = vadd.f32 %v698, %v877
  %v879 = vpop.f32.mrb[0].mxu0
  %v880 = vpop.f32.mrb[0].mxu0
  %v881 = vadd.f32 %v703, %v880
  %v882 = vpop.f32.mrb[0].mxu0
  %883 = vmatprep.mubr.bf16.mxu0 %v778
  %884 = vmatmul.mubr.bf16.gmra.mrb[0].mxu0 %v777
  %v885 = vpop.f32.mrb[0].mxu0
  %v886 = vadd.f32 %v708, %v885
  %v887 = vpop.f32.mrb[0].mxu0
  %v888 = vpop.f32.mrb[0].mxu0
  %v889 = vadd.f32 %v713, %v888
  %v890 = vpop.f32.mrb[0].mxu0
  %891 = vdwg.mxu0
  %v892 = vmax.f32 %v830, 0.0
  %v893 = vmax.f32 %v833, 0.0
  %v894 = vmax.f32 %v838, 0.0
  %v895 = vmax.f32 %v841, 0.0
  %v896 = vmax.f32 %v846, 0.0
  %v897 = vmax.f32 %v849, 0.0
  %v898 = vmax.f32 %v854, 0.0
  %v899 = vmax.f32 %v857, 0.0
  %v900 = vmax.f32 %v862, 0.0
  %v901 = vmax.f32 %v865, 0.0
  %v902 = vmax.f32 %v870, 0.0
  %v903 = vmax.f32 %v873, 0.0
  %v904 = vmax.f32 %v878, 0.0
  %v905 = vmax.f32 %v881, 0.0
  %v906 = vmax.f32 %v886, 0.0
  %v907 = vmax.f32 %v889, 0.0
  %v908 = vld [vmem:[%s5] sm:$0xf]
  %v909 = vld [vmem:[%s5 + $0x4] sm:$0xf]
  %v910 = vld [vmem:[%s5 + $0x8] sm:$0xf]
  %v911 = vld [vmem:[%s5 + $0xc] sm:$0xf]
  %v912 = vld [vmem:[%s5 + $0x10] sm:$0xf]
  %v913 = vld [vmem:[%s5 + $0x14] sm:$0xf]
  %v914 = vld [vmem:[%s5 + $0x18] sm:$0xf]
  %v915 = vld [vmem:[%s5 + $0x1c] sm:$0xf]
  %v916 = vpack.c.bf16 %v893, %v892
  %v917 = vpack.c.bf16 %v895, %v894
  %v918 = vpack.c.bf16 %v897, %v896
  %v919 = vpack.c.bf16 %v899, %v898
  %v920 = vpack.c.bf16 %v901, %v900
  %v921 = vpack.c.bf16 %v903, %v902
  %v922 = vpack.c.bf16 %v905, %v904
  %v923 = vpack.c.bf16 %v907, %v906
  %v924 = vld [vmem:[%s6] sm:$0xff]
  %v925 = vld [vmem:[%s6 + $0x8] sm:$0xff]
  %v926 = vld [vmem:[%s6 + $0x10] sm:$0xff]
  %v927 = vld [vmem:[%s6 + $0x18] sm:$0xff]
  %v928 = vld [vmem:[%s6 + $0x20] sm:$0xff]
  %v929 = vld [vmem:[%s6 + $0x28] sm:$0xff]
  %v930 = vld [vmem:[%s6 + $0x30] sm:$0xff]
  %v931 = vld [vmem:[%s6 + $0x38] sm:$0xff]
  %933 = vset.pattern.permute.xlu0 0
  %934 = vperm.xlu0 %933, %v924
  %v935 = vpop.permute.xlu0 %934
  %938 = vset.pattern.permute.xlu0 0
  %939 = vperm.xlu0 %938, %v925
  %v940 = vpop.permute.xlu0 %939
  %943 = vset.pattern.permute.xlu0 0
  %944 = vperm.xlu0 %943, %v926
  %v945 = vpop.permute.xlu0 %944
  %948 = vset.pattern.permute.xlu0 0
  %949 = vperm.xlu0 %948, %v927
  %v950 = vpop.permute.xlu0 %949
  %953 = vset.pattern.permute.xlu0 0
  %954 = vperm.xlu0 %953, %v928
  %v955 = vpop.permute.xlu0 %954
  %958 = vset.pattern.permute.xlu0 0
  %959 = vperm.xlu0 %958, %v929
  %v960 = vpop.permute.xlu0 %959
  %963 = vset.pattern.permute.xlu0 0
  %964 = vperm.xlu0 %963, %v930
  %v965 = vpop.permute.xlu0 %964
  %968 = vset.pattern.permute.xlu0 0
  %969 = vperm.xlu0 %968, %v931
  %v970 = vpop.permute.xlu0 %969
  %v980 = vunpack.c.l.b16 %v908
  %v981 = vunpack.c.l.b16 %v909
  %v982 = vunpack.c.l.b16 %v910
  %v983 = vunpack.c.l.b16 %v911
  %v984 = vunpack.c.l.b16 %v912
  %v985 = vunpack.c.l.b16 %v913
  %v986 = vunpack.c.l.b16 %v914
  %v987 = vunpack.c.l.b16 %v915
  %v988 = vpack.c.b16 %v981, %v980
  %v989 = vpack.c.b16 %v983, %v982
  %v990 = vpack.c.b16 %v985, %v984
  %v991 = vpack.c.b16 %v987, %v986
  %996 = vmatprep.subr.bf16.mxu0 0
  %997 = vmatpush1.bf16.msra.mxu0 %v916
  %998 = vmatprep.subr.bf16.mxu0 0
  %999 = vmatpush1.bf16.msra.mxu0 %v917
  %1000 = vmatprep.subr.bf16.mxu0 0
  %1001 = vmatpush1.bf16.msra.mxu0 %v918
  %1002 = vmatprep.subr.bf16.mxu0 0
  %1003 = vmatpush1.bf16.msra.mxu0 %v919
  %1004 = vmatprep.subr.bf16.mxu0 0
  %1005 = vmatpush1.bf16.msra.mxu0 %v920
  %1006 = vmatprep.subr.bf16.mxu0 0
  %1007 = vmatpush1.bf16.msra.mxu0 %v921
  %1008 = vmatprep.subr.bf16.mxu0 0
  %1009 = vmatpush1.bf16.msra.mxu0 %v922
  %1010 = vmatprep.subr.bf16.mxu0 0
  %1011 = vmatpush1.bf16.msra.mxu0 %v923
  %1012 = vmatprep.subr.bf16.mxu0 0
  %1013 = vmatpush1.bf16.msra.mxu0 0
  %1014 = vmatprep.subr.bf16.mxu0 0
  %1015 = vmatpush1.bf16.msra.mxu0 0
  %1016 = vmatprep.subr.bf16.mxu0 0
  %1017 = vmatpush1.bf16.msra.mxu0 0
  %1018 = vmatprep.subr.bf16.mxu0 0
  %1019 = vmatpush1.bf16.msra.mxu0 0
  %1020 = vmatprep.subr.bf16.mxu0 0
  %1021 = vmatpush1.bf16.msra.mxu0 0
  %1022 = vmatprep.subr.bf16.mxu0 0
  %1023 = vmatpush1.bf16.msra.mxu0 0
  %1024 = vmatprep.subr.bf16.mxu0 0
  %1025 = vmatpush1.bf16.msra.mxu0 0
  %1026 = vmatprep.subr.bf16.mxu0 0
  %1027 = vmatpush1.bf16.msra.mxu0 0
  %1028 = vmatprep.mubr.bf16.mxu0 0
  %1029 = vmatmul.mubr.bf16.gmra.mrb[0].mxu0 %v988
  %v1030 = vpop.f32.mrb[0].mxu0
  %v1031 = vadd.f32 %v935, %v1030
  %v1032 = vpop.f32.mrb[0].mxu0
  %v1033 = vpop.f32.mrb[0].mxu0
  %v1034 = vadd.f32 %v940, %v1033
  %v1035 = vpop.f32.mrb[0].mxu0
  %1036 = vmatprep.mubr.bf16.mxu0 0
  %1037 = vmatmul.mubr.bf16.gmra.mrb[0].mxu0 %v989
  %v1038 = vpop.f32.mrb[0].mxu0
  %v1039 = vadd.f32 %v945, %v1038
  %v1040 = vpop.f32.mrb[0].mxu0
  %v1041 = vpop.f32.mrb[0].mxu0
  %v1042 = vadd.f32 %v950, %v1041
  %v1043 = vpop.f32.mrb[0].mxu0
  %1044 = vmatprep.mubr.bf16.mxu0 0
  %1045 = vmatmul.mubr.bf16.gmra.mrb[0].mxu0 %v990
  %v1046 = vpop.f32.mrb[0].mxu0
  %v1047 = vadd.f32 %v955, %v1046
  %v1048 = vpop.f32.mrb[0].mxu0
  %v1049 = vpop.f32.mrb[0].mxu0
  %v1050 = vadd.f32 %v960, %v1049
  %v1051 = vpop.f32.mrb[0].mxu0
  %1052 = vmatprep.mubr.bf16.mxu0 0
  %1053 = vmatmul.mubr.bf16.gmra.mrb[0].mxu0 %v991
  %v1054 = vpop.f32.mrb[0].mxu0
  %v1055 = vadd.f32 %v965, %v1054
  %v1056 = vpop.f32.mrb[0].mxu0
  %v1057 = vpop.f32.mrb[0].mxu0
  %v1058 = vadd.f32 %v970, %v1057
  %v1059 = vpop.f32.mrb[0].mxu0
  %1060 = vdwg.mxu0
  %v1061 = vmax.f32 %v1031, 0.0
  %v1062 = vmax.f32 %v1034, 0.0
  %v1063 = vmax.f32 %v1039, 0.0
  %v1064 = vmax.f32 %v1042, 0.0
  %v1065 = vmax.f32 %v1047, 0.0
  %v1066 = vmax.f32 %v1050, 0.0
  %v1067 = vmax.f32 %v1055, 0.0
  %v1068 = vmax.f32 %v1058, 0.0
  %v1069 = vld [vmem:[%s7] sm:$0xff]
  %v1070 = vld [vmem:[%s7 + $0x8] sm:$0xff]
  %v1071 = vld [vmem:[%s7 + $0x10] sm:$0xff]
  %v1072 = vld [vmem:[%s7 + $0x18] sm:$0xff]
  %v1073 = vld [vmem:[%s7 + $0x20] sm:$0xff]
  %v1074 = vld [vmem:[%s7 + $0x28] sm:$0xff]
  %v1075 = vld [vmem:[%s7 + $0x30] sm:$0xff]
  %v1076 = vld [vmem:[%s7 + $0x38] sm:$0xff]
  %1078 = vset.pattern.permute.xlu0 0
  %1079 = vperm.xlu0 %1078, %v1069
  %v1080 = vpop.permute.xlu0 %1079
  %1083 = vset.pattern.permute.xlu0 0
  %1084 = vperm.xlu0 %1083, %v1070
  %v1085 = vpop.permute.xlu0 %1084
  %1088 = vset.pattern.permute.xlu0 0
  %1089 = vperm.xlu0 %1088, %v1071
  %v1090 = vpop.permute.xlu0 %1089
  %1093 = vset.pattern.permute.xlu0 0
  %1094 = vperm.xlu0 %1093, %v1072
  %v1095 = vpop.permute.xlu0 %1094
  %1098 = vset.pattern.permute.xlu0 0
  %1099 = vperm.xlu0 %1098, %v1073
  %v1100 = vpop.permute.xlu0 %1099
  %1103 = vset.pattern.permute.xlu0 0
  %1104 = vperm.xlu0 %1103, %v1074
  %v1105 = vpop.permute.xlu0 %1104
  %1108 = vset.pattern.permute.xlu0 0
  %1109 = vperm.xlu0 %1108, %v1075
  %v1110 = vpop.permute.xlu0 %1109
  %1113 = vset.pattern.permute.xlu0 0
  %1114 = vperm.xlu0 %1113, %v1076
  %v1115 = vpop.permute.xlu0 %1114
  %v1117 = vmul.f32 %v1061, %v1080
  %v1118 = vmul.f32 %v1062, %v1085
  %v1119 = vmul.f32 %v1063, %v1090
  %v1120 = vmul.f32 %v1064, %v1095
  %v1121 = vmul.f32 %v1065, %v1100
  %v1122 = vmul.f32 %v1066, %v1105
  %v1123 = vmul.f32 %v1067, %v1110
  %v1124 = vmul.f32 %v1068, %v1115
  %v1125 = vadd.f32 %v1117, %v1118
  %v1126 = vadd.f32 %v1125, %v1119
  %v1127 = vadd.f32 %v1126, %v1120
  %v1128 = vadd.f32 %v1127, %v1121
  %v1129 = vadd.f32 %v1128, %v1122
  %v1130 = vadd.f32 %v1129, %v1123
  %v1131 = vadd.f32 %v1130, %v1124
  %v1132 = vrot.slane %v1131, 4
  %v1133 = vadd.f32 %v1131, %v1132
  %v1134 = vrot.slane %v1133, 2
  %v1135 = vadd.f32 %v1133, %v1134
  %v1136 = vrot.slane %v1135, 1
  %v1137 = vadd.f32 %v1135, %v1136
  %v1138 = vld [vmem:[#allocation2] sm:$0x1]
  %1140 = vset.pattern.permute.xlu0 0
  %1141 = vperm.xlu0 %1140, %v1138
  %v1142 = vpop.permute.xlu0 %1141
  %v1144 = vlaneseq
  %v1145 = vshrl.u32 %v1144, 7
  %v1146 = vsub.s32 0, %v1145
  %v1147 = vrot.slane %v1142, %v1146
  %v1148 = vadd.f32 %v1137, %v1147
  %1149 = vst [vmem:[%s9] sm:$0x1] %v1148
  // Predicated region
  $region38: #{ndvi_mlp.1} parent=0 // pred_check
    _
  $region39: #{ndvi_mlp.1} parent=0 // pred_check_branch
    %1151 = sbr.rel (0) target = $region41
  $region40: #{ndvi_mlp.1} parent=0 // pred_region
    _
  $region41: #{ndvi_mlp.1} parent=0 // pred_fallthru
    _
  // Predicated region
  $region42: #{ndvi_mlp.1} parent=0 // pred_check
    _
  $region43: #{ndvi_mlp.1} parent=0 // pred_check_branch
    %1153 = sbr.rel (0) target = $region45
  $region44: #{ndvi_mlp.1} parent=0 // pred_region
    _
  $region45: #{ndvi_mlp.1} parent=0 // pred_fallthru
    _

</llo_original>
